<compile_context>
chip_gen: v6e
topology: v6e:2x2x1
jax: 0.10.0
libtpu: 0.0.40
codegen_flags: <defaults>
</compile_context>

<pallas_src>
import jax
import jax.numpy as jnp
from jax.experimental import pallas as pl
from jax.experimental.pallas import tpu as pltpu


# ----------------------------------------------------------------------------- kernel ---
def mlp_kernel(x_ref, w1_ref, b1_ref, w2_ref, b2_ref, w3_ref, b3_ref, o_ref):
    # Fused 3-layer MLP for one batch tile (batch on sublanes through layer 2).
    x = x_ref[...]                                                        # (tile, D)
    h1 = jnp.dot(x, w1_ref[...], preferred_element_type=jnp.float32) + b1_ref[...]
    h1 = jnp.maximum(h1, 0.0)                                             # (tile, 64) f32
    h2 = jnp.dot(h1.astype(w2_ref.dtype), w2_ref[...],
                 preferred_element_type=jnp.float32) + b2_ref[...]
    h2 = jnp.maximum(h2, 0.0)                                             # (tile, 32) f32
    # Final layer in batch-on-lanes form: (1, 32) x (tile, 32)^T -> (1, tile).
    # Keeps the output store lane-dense (no masked 1-lane partial stores).
    out_row = jnp.einsum("ok,nk->on", w3_ref[...].astype(jnp.float32), h2,
                         preferred_element_type=jnp.float32)
    out_row = out_row + b3_ref[0]                                         # scalar bias (SMEM)
    o_ref[...] = out_row.astype(o_ref.dtype)


# ------------------------------------------------------------------------ tiling logic ---
def _cdiv(a, b):
    return (a + b - 1) // b


def _round_up(n, m):
    return ((n + m - 1) // m) * m


def _tpu_generation_info():
    """Best-effort (vmem_capacity_bytes, tensorcores_per_chip) with safe fallbacks."""
    vmem_cap = 128 * 1024 * 1024   # v5e / v6e default
    num_cores = 1
    try:
        info = pltpu.get_tpu_info()
        for name in ("vmem_capacity_bytes", "vmem_bytes", "vmem_size_bytes"):
            v = getattr(info, name, None)
            if isinstance(v, int) and v > 0:
                vmem_cap = v
                break
        for name in ("num_tensorcores", "tensorcores_per_chip", "num_cores",
                     "cores_per_chip"):
            v = getattr(info, name, None)
            if isinstance(v, int) and v > 0:
                num_cores = v
                break
    except Exception:
        pass
    if num_cores == 1:
        try:
            kind = jax.devices()[0].device_kind.lower()
            if "v7" in kind or "7x" in kind:
                num_cores = 2
        except Exception:
            pass
    return vmem_cap, num_cores


def _pick_batch_tile(batch, input_dim, dtype_bytes, workset_budget_bytes, num_cores):
    """Largest lane-aligned (multiple-of-128) batch tile fitting the VMEM budget."""
    d_pad = _round_up(input_dim, 128)          # VMEM lane padding of the x tile
    b_aligned = _round_up(batch, 128)
    tile = 128
    for t in (16384, 8192, 4096, 2048, 1024, 512, 256, 128):
        if t > b_aligned:
            continue
        est = (2 * t * d_pad * dtype_bytes      # double-buffered x tile
               + 4 * t * 128 * 4                # h1/h2 + transpose/out temps (f32, lane-padded)
               + 2 * 8 * t * 4                  # double-buffered (1, tile) output row
               + 2 * d_pad * 128 * dtype_bytes  # double-buffered W1 (dominant weight)
               + (1 << 20))                     # slack: small weights/biases/internal scratch
        if est <= workset_budget_bytes:
            tile = t
            break
    # On multi-TensorCore chips (v7x) prefer an EVEN number of grid steps so the
    # "parallel" batch axis load-balances across both cores.  Skip on v5e/v6e (1 TC).
    if num_cores >= 2:
        t = tile
        while t > 128 and _cdiv(batch, t) % 2 == 1:
            t //= 2
        if _cdiv(batch, t) % 2 == 0:
            tile = t
    return tile


# ----------------------------------------------------------------------------- wrapper ---
def ranking_forward(x, params, *, tile_b=None,
                    vmem_limit_bytes=None, workset_budget_bytes=None):
    """x: (B, input_dim). Returns (B,) of x.dtype (matches network(x).squeeze(-1)).

    The kernel is dtype-generic; pass bf16 x and bf16 weights for the fast path
    (do NOT cast here in the wrapper -- that would add its own HBM pass).
    """
    B, D = x.shape
    w1, b1, w2, b2, w3, b3 = params
    # Row-form of the last layer is only a transpose because the head has 1 output.
    assert w3.shape[-1] == 1, "final layer must have a single output for the row trick"
    w3_row = w3.reshape(1, w3.shape[0])     # (1, 32)
    b1 = b1.reshape(1, -1)                  # (1, 64)
    b2 = b2.reshape(1, -1)                  # (1, 32)
    b3_s = b3.reshape(-1)                   # (1,): scalar bias, routed through SMEM

    vmem_cap, num_cores = _tpu_generation_info()
    if vmem_limit_bytes is None:
        vmem_limit_bytes = max(32 << 20, min(int(0.70 * vmem_cap), 100 << 20))
    if workset_budget_bytes is None:
        workset_budget_bytes = int(0.60 * vmem_limit_bytes)

    itemsize = x.dtype.itemsize
    if B < 128:
        # Single full-array block: block dims == array dims, no alignment/padding needed.
        tile = B
    else:
        tile = _pick_batch_tile(B, D, itemsize, workset_budget_bytes, num_cores)
        if tile_b is not None:
            tile = min(tile, max(128, _round_up(int(tile_b), 128)))
    num_tiles = _cdiv(B, tile)   # last block may be partial -> masked by Pallas (no pad copy)

    flops = 2 * B * (D * 64 + 64 * 32 + 32 * 1)
    weight_bytes = sum(int(p.size) * p.dtype.itemsize
                       for p in (w1, b1, w2, b2, w3_row, b3_s))
    bytes_accessed = B * D * itemsize + B * itemsize + weight_bytes

    out = pl.pallas_call(
        mlp_kernel,
        out_shape=jax.ShapeDtypeStruct((1, B), x.dtype),
        grid=(num_tiles,),
        in_specs=[
            pl.BlockSpec((tile, D), lambda i: (i, 0)),          # x tile (batch on sublanes)
            pl.BlockSpec((D, 64), lambda i: (0, 0)),            # W1 (resident)
            pl.BlockSpec((1, 64), lambda i: (0, 0)),            # b1
            pl.BlockSpec((64, 32), lambda i: (0, 0)),           # W2
            pl.BlockSpec((1, 32), lambda i: (0, 0)),            # b2
            pl.BlockSpec((1, 32), lambda i: (0, 0)),            # W3^T (row form)
            pl.BlockSpec(memory_space=pltpu.MemorySpace.SMEM),  # b3 scalar
        ],
        out_specs=pl.BlockSpec((1, tile), lambda i: (0, i)),    # lane-dense output row
        compiler_params=pltpu.CompilerParams(
            dimension_semantics=("parallel",),
            vmem_limit_bytes=vmem_limit_bytes),
        cost_estimate=pl.CostEstimate(flops=flops, transcendentals=0,
                                      bytes_accessed=bytes_accessed),
    )(x, w1, b1, w2, b2, w3_row, b3_s)

    return out.reshape(B)


# --------------------------------------------------------------------- params & reference ---
def init_params(key, input_dim):
    """Deterministic init mimicking nn.Linear: U(-1/sqrt(fan_in), 1/sqrt(fan_in))."""
    dims = [(input_dim, 64), (64, 32), (32, 1)]
    params = []
    for (fan_in, fan_out) in dims:
        key, kw, kb = jax.random.split(key, 3)
        bound = 1.0 / jnp.sqrt(fan_in)
        w = jax.random.uniform(kw, (fan_in, fan_out), jnp.float32, -bound, bound)
        b = jax.random.uniform(kb, (1, fan_out), jnp.float32, -bound, bound)
        params.extend([w, b])
    return tuple(params)


def ranking_forward_ref(x, params):
    w1, b1, w2, b2, w3, b3 = params
    h1 = jnp.maximum(x @ w1 + b1, 0.0)
    h2 = jnp.maximum(h1 @ w2 + b2, 0.0)
    return (h2 @ w3 + b3).squeeze(-1)


if __name__ == "__main__":
    key = jax.random.PRNGKey(0)
    k_x, k_p = jax.random.split(key)

    batch, input_dim = 8, 32
    x = jax.random.normal(k_x, (batch, input_dim), jnp.float32)
    params = init_params(k_p, input_dim)

    y = ranking_forward(x, params)
    y = jax.block_until_ready(y)

    y_ref = ranking_forward_ref(x, params)
    assert y.shape == (batch,)
    assert jnp.allclose(y, y_ref, atol=1e-5, rtol=1e-5), "mismatch vs reference"

    print("KERNEL_OK")
</pallas_src>

<mosaic_0001>
module attributes {stable_mosaic.version = 11 : i64} {
  func.func @mlp_kernel(%arg0: i32, %arg1: memref<8x32xf32, #tpu.memory_space<vmem>>, %arg2: memref<32x64xf32, #tpu.memory_space<vmem>>, %arg3: memref<1x64xf32, #tpu.memory_space<vmem>>, %arg4: memref<64x32xf32, #tpu.memory_space<vmem>>, %arg5: memref<1x32xf32, #tpu.memory_space<vmem>>, %arg6: memref<1x32xf32, #tpu.memory_space<vmem>>, %arg7: memref<1xf32, #tpu.memory_space<smem>>, %arg8: memref<1x8xf32, #tpu.memory_space<vmem>>) attributes {dimension_semantics = [#tpu.dimension_semantics<parallel>], iteration_bounds = array<i64: 1>, scalar_prefetch = 0 : i64, scratch_operands = 0 : i64, tpu.core_type = #tpu.core_type<tc>, window_params = [{transform_indices = @transform_0, window_bounds = array<i64: 8, 32>}, {pipeline_mode = #tpu.pipeline_mode<synchronous>, transform_indices = @transform_1, window_bounds = array<i64: 32, 64>}, {pipeline_mode = #tpu.pipeline_mode<synchronous>, transform_indices = @transform_2, window_bounds = array<i64: 1, 64>}, {pipeline_mode = #tpu.pipeline_mode<synchronous>, transform_indices = @transform_3, window_bounds = array<i64: 64, 32>}, {pipeline_mode = #tpu.pipeline_mode<synchronous>, transform_indices = @transform_4, window_bounds = array<i64: 1, 32>}, {pipeline_mode = #tpu.pipeline_mode<synchronous>, transform_indices = @transform_5, window_bounds = array<i64: 1, 32>}, {transform_indices = @transform_6, window_bounds = array<i64: 1>}, {transform_indices = @transform_7, window_bounds = array<i64: 1, 8>}]} {
    %c0 = arith.constant 0 : index
    %c0_0 = arith.constant 0 : index
    %0 = vector.load %arg1[%c0, %c0_0] : memref<8x32xf32, #tpu.memory_space<vmem>>, vector<8x32xf32>
    %c0_1 = arith.constant 0 : index
    %c0_2 = arith.constant 0 : index
    %1 = vector.load %arg2[%c0_1, %c0_2] : memref<32x64xf32, #tpu.memory_space<vmem>>, vector<32x64xf32>
    %cst = arith.constant dense<0.000000e+00> : vector<8x64xf32>
    %2 = tpu.matmul %0, %1, %cst {dimension_numbers = #tpu.dot_dimension_numbers<[1], [0], [0], [1], [0, 0, 1, 1], [], []>} : vector<8x32xf32>, vector<32x64xf32>, vector<8x64xf32> -> vector<8x64xf32>
    %c0_3 = arith.constant 0 : index
    %c0_4 = arith.constant 0 : index
    %3 = vector.load %arg3[%c0_3, %c0_4] : memref<1x64xf32, #tpu.memory_space<vmem>>, vector<1x64xf32>
    %4 = vector.broadcast %3 : vector<1x64xf32> to vector<8x64xf32>
    %5 = arith.addf %2, %4 : vector<8x64xf32>
    %cst_5 = arith.constant 0.000000e+00 : f32
    %6 = vector.broadcast %cst_5 : f32 to vector<8x64xf32>
    %7 = arith.maximumf %5, %6 : vector<8x64xf32>
    %c0_6 = arith.constant 0 : index
    %c0_7 = arith.constant 0 : index
    %8 = vector.load %arg4[%c0_6, %c0_7] : memref<64x32xf32, #tpu.memory_space<vmem>>, vector<64x32xf32>
    %cst_8 = arith.constant dense<0.000000e+00> : vector<8x32xf32>
    %9 = tpu.matmul %7, %8, %cst_8 {dimension_numbers = #tpu.dot_dimension_numbers<[1], [0], [0], [1], [0, 0, 1, 1], [], []>} : vector<8x64xf32>, vector<64x32xf32>, vector<8x32xf32> -> vector<8x32xf32>
    %c0_9 = arith.constant 0 : index
    %c0_10 = arith.constant 0 : index
    %10 = vector.load %arg5[%c0_9, %c0_10] : memref<1x32xf32, #tpu.memory_space<vmem>>, vector<1x32xf32>
    %11 = vector.broadcast %10 : vector<1x32xf32> to vector<8x32xf32>
    %12 = arith.addf %9, %11 : vector<8x32xf32>
    %cst_11 = arith.constant 0.000000e+00 : f32
    %13 = vector.broadcast %cst_11 : f32 to vector<8x32xf32>
    %14 = arith.maximumf %12, %13 : vector<8x32xf32>
    %c0_12 = arith.constant 0 : index
    %c0_13 = arith.constant 0 : index
    %15 = vector.load %arg6[%c0_12, %c0_13] : memref<1x32xf32, #tpu.memory_space<vmem>>, vector<1x32xf32>
    "tpu.trace_start"() <{level = 10 : i32, message = "ok,nk->on"}> : () -> ()
    %cst_14 = arith.constant dense<0.000000e+00> : vector<1x8xf32>
    %16 = tpu.matmul %15, %14, %cst_14 {dimension_numbers = #tpu.dot_dimension_numbers<[1], [1], [0], [0], [0, 0, 1, 0], [], []>} : vector<1x32xf32>, vector<8x32xf32>, vector<1x8xf32> -> vector<1x8xf32>
    "tpu.trace_stop"() : () -> ()
    %c0_15 = arith.constant 0 : index
    %17 = memref.load %arg7[%c0_15] : memref<1xf32, #tpu.memory_space<smem>>
    %18 = vector.broadcast %17 : f32 to vector<1x8xf32>
    %19 = arith.addf %16, %18 : vector<1x8xf32>
    %c0_16 = arith.constant 0 : index
    %c0_17 = arith.constant 0 : index
    %20 = vector.load %arg8[%c0_16, %c0_17] : memref<1x8xf32, #tpu.memory_space<vmem>>, vector<1x8xf32>
    tpu.vector_store %arg8[%c0_16, %c0_17], %19 {strides = array<i32>} : memref<1x8xf32, #tpu.memory_space<vmem>>, vector<1x8xf32>,
    return
  }
  func.func @transform_0(%arg0: i32) -> (i32, i32) {
    %c0_i32 = arith.constant 0 : i32
    %c0_i32_0 = arith.constant 0 : i32
    return %arg0, %c0_i32 : i32, i32
  }
  func.func @transform_1(%arg0: i32) -> (i32, i32) {
    %c0_i32 = arith.constant 0 : i32
    %c0_i32_0 = arith.constant 0 : i32
    %c0_i32_1 = arith.constant 0 : i32
    return %c0_i32, %c0_i32_0 : i32, i32
  }
  func.func @transform_2(%arg0: i32) -> (i32, i32) {
    %c0_i32 = arith.constant 0 : i32
    %c0_i32_0 = arith.constant 0 : i32
    %c0_i32_1 = arith.constant 0 : i32
    return %c0_i32, %c0_i32_0 : i32, i32
  }
  func.func @transform_3(%arg0: i32) -> (i32, i32) {
    %c0_i32 = arith.constant 0 : i32
    %c0_i32_0 = arith.constant 0 : i32
    %c0_i32_1 = arith.constant 0 : i32
    return %c0_i32, %c0_i32_0 : i32, i32
  }
  func.func @transform_4(%arg0: i32) -> (i32, i32) {
    %c0_i32 = arith.constant 0 : i32
    %c0_i32_0 = arith.constant 0 : i32
    %c0_i32_1 = arith.constant 0 : i32
    return %c0_i32, %c0_i32_0 : i32, i32
  }
  func.func @transform_5(%arg0: i32) -> (i32, i32) {
    %c0_i32 = arith.constant 0 : i32
    %c0_i32_0 = arith.constant 0 : i32
    %c0_i32_1 = arith.constant 0 : i32
    return %c0_i32, %c0_i32_0 : i32, i32
  }
  func.func @transform_6(%arg0: i32) -> i32 {
    %c0_i32 = arith.constant 0 : i32
    %c0_i32_0 = arith.constant 0 : i32
    return %c0_i32 : i32
  }
  func.func @transform_7(%arg0: i32) -> (i32, i32) {
    %c0_i32 = arith.constant 0 : i32
    %c0_i32_0 = arith.constant 0 : i32
    return %c0_i32, %arg0 : i32, i32
  }
}

</mosaic_0001>

<llo_original>
// kernel: tpu_custom_call.1
$region0: #{tpu_custom_call.1}
  #allocation0 [shape = 'u32[]', space=smem, size = 0x4, offset = 0x4, fixed_abs, tag = 'smem constant byte address 0x4 - core index']
  #allocation1 [shape = 'u32[144,128]{1,0:T(1,128)}', space=vmem, size = 0x12000, scoped, tag = 'internal scratch']
  #allocation2 [shape = 'f32[1]{0:T(128)S(6)}', space=smem, size = 0x200, scoped, tag = 'scoped memory for tpu_custom_call.1']
  %s0 = inlined_call_operand.vmem [shape: f32[8,32], index: 0, kind: input, shape index: {}]
  %s1 = inlined_call_operand.vmem [shape: f32[32,64], index: 1, kind: input, shape index: {}]
  %s2 = inlined_call_operand.vmem [shape: f32[1,64], index: 2, kind: input, shape index: {}]
  %s3 = inlined_call_operand.vmem [shape: f32[64,32], index: 3, kind: input, shape index: {}]
  %s4 = inlined_call_operand.vmem [shape: f32[1,32], index: 4, kind: input, shape index: {}]
  %s5 = inlined_call_operand.vmem [shape: f32[1,32], index: 5, kind: input, shape index: {}]
  %s6 = inlined_call_operand.<no memory space> [shape: f32[1], index: 6, kind: input, shape index: {}]
  %s7 = inlined_call_operand.hbm [shape: f32[1,8], index: 7, kind: output, shape index: {}]
  %s8 = sld [smem:[#allocation0]]
  $region38: #{tpu_custom_call.1} parent=0
    _
  %s10 = ssub.s32 1, %s8
  %s11 = scalar_select 0, %s10, %s8
  %12 = sst [smem:[#allocation2]] %s6
  $region1: #{tpu_custom_call.1} parent=0
    #allocation3 [shape = 'u8[512]{0}', space=vmem, size = 0x400, scoped, tag = 'output window, operand 0, single buffered']
    #allocation4 [shape = 's32[1]{0}', space=sflag, size = 0x4, scoped, tag = 'scoped memory for tpu_custom_call.1']
    %13 = vsyncpa [#allocation4], 0
    // Predicated region
    $region2: #{tpu_custom_call.1} parent=1 // pred_check
      _
    $region3: #{tpu_custom_call.1} parent=1 // pred_check_branch
      %15 = sbr.rel (0) target = $region5
    $region4: #{tpu_custom_call.1} parent=1 // pred_region
      _
    $region5: #{tpu_custom_call.1} parent=1 // pred_fallthru
      _
    // Predicated region
    $region6: #{tpu_custom_call.1} parent=1 // pred_check
      _
    $region7: #{tpu_custom_call.1} parent=1 // pred_check_branch
      %17 = sbr.rel (0) target = $region9
    $region8: #{tpu_custom_call.1} parent=1 // pred_region
      _
    $region9: #{tpu_custom_call.1} parent=1 // pred_fallthru
      _
    // Predicated region
    $region10: #{tpu_custom_call.1} parent=1 // pred_check
      _
    $region11: #{tpu_custom_call.1} parent=1 // pred_check_branch
      %19 = sbr.rel (0) target = $region13
    $region12: #{tpu_custom_call.1} parent=1 // pred_region
      _
    $region13: #{tpu_custom_call.1} parent=1 // pred_fallthru
      _
    // Predicated region
    $region14: #{tpu_custom_call.1} parent=1 // pred_check
      _
    $region15: #{tpu_custom_call.1} parent=1 // pred_check_branch
      %21 = sbr.rel (0) target = $region17
    $region16: #{tpu_custom_call.1} parent=1 // pred_region
      _
    $region17: #{tpu_custom_call.1} parent=1 // pred_fallthru
      _
    // Predicated region
    $region18: #{tpu_custom_call.1} parent=1 // pred_check
      _
    $region19: #{tpu_custom_call.1} parent=1 // pred_check_branch
      %23 = sbr.rel (0) target = $region21
    $region20: #{tpu_custom_call.1} parent=1 // pred_region
      _
    $region21: #{tpu_custom_call.1} parent=1 // pred_fallthru
      _
    // Predicated region
    $region22: #{tpu_custom_call.1} parent=1 // pred_check
      _
    $region23: #{tpu_custom_call.1} parent=1 // pred_check_branch
      %25 = sbr.rel (0) target = $region25
    $region24: #{tpu_custom_call.1} parent=1 // pred_region
      _
    $region25: #{tpu_custom_call.1} parent=1 // pred_fallthru
      _
    // Predicated region
    $region26: #{tpu_custom_call.1} parent=1 // pred_check
      _
    $region27: #{tpu_custom_call.1} parent=1 // pred_check_branch
      %27 = sbr.rel (0) target = $region29
    $region28: #{tpu_custom_call.1} parent=1 // pred_region
      _
    $region29: #{tpu_custom_call.1} parent=1 // pred_fallthru
      _
    %v28 = vld [vmem:[%s0] sm:$0xff]
    %v29 = vld [vmem:[%s1] sm:$0xff]
    %v30 = vld [vmem:[%s1 + $0x8] sm:$0xff]
    %v31 = vld [vmem:[%s1 + $0x10] sm:$0xff]
    %v32 = vld [vmem:[%s1 + $0x18] sm:$0xff]
    %v33 = vld [vmem:[%s2] sm:$0x1]
    %v35 = vlaneseq
    %v36 = vshrl.u32 %v35, 7
    %v37 = vsub.s32 0, %v36
    %v38 = vrot.slane %v33, %v37
    %vm40 = vcmask 261120
    %v42 = vsel %vm40, %v28, 0
    %44 = vmatprep.subr.mxu0 0.0
    %45 = vmatpush1.msra.mxu0 0.0
    %46 = vmatprep.subr.mxu0 0.0
    %47 = vmatpush1.msra.mxu0 0.0
    %48 = vmatprep.subr.mxu0 0.0
    %49 = vmatpush1.msra.mxu0 0.0
    %50 = vmatprep.subr.mxu0 0.0
    %51 = vmatpush1.msra.mxu0 0.0
    %52 = vmatprep.subr.mxu0 0.0
    %53 = vmatpush1.msra.mxu0 0.0
    %54 = vmatprep.subr.mxu0 0.0
    %55 = vmatpush1.msra.mxu0 0.0
    %56 = vmatprep.subr.mxu0 0.0
    %57 = vmatpush1.msra.mxu0 0.0
    %58 = vmatprep.subr.mxu0 0.0
    %59 = vmatpush1.msra.mxu0 0.0
    %60 = vmatprep.subr.mxu0 0.0
    %61 = vmatpush1.msra.mxu0 0.0
    %62 = vmatprep.subr.mxu0 0.0
    %63 = vmatpush1.msra.mxu0 0.0
    %64 = vmatprep.subr.mxu0 0.0
    %65 = vmatpush1.msra.mxu0 0.0
    %66 = vmatprep.subr.mxu0 0.0
    %67 = vmatpush1.msra.mxu0 0.0
    %68 = vmatprep.subr.mxu0 0.0
    %69 = vmatpush1.msra.mxu0 %v32
    %70 = vmatprep.subr.mxu0 0.0
    %71 = vmatpush1.msra.mxu0 %v31
    %72 = vmatprep.subr.mxu0 0.0
    %73 = vmatpush1.msra.mxu0 %v30
    %74 = vmatprep.subr.mxu0 0.0
    %75 = vmatpush1.msra.mxu0 %v29
    %76 = vmatprep.subr.mxu0 0.0
    %77 = vmatpush2.msra.mxu0 0.0
    %78 = vmatprep.subr.mxu0 0.0
    %79 = vmatpush2.msra.mxu0 0.0
    %80 = vmatprep.subr.mxu0 0.0
    %81 = vmatpush2.msra.mxu0 0.0
    %82 = vmatprep.subr.mxu0 0.0
    %83 = vmatpush2.msra.mxu0 0.0
    %84 = vmatprep.subr.mxu0 0.0
    %85 = vmatpush2.msra.mxu0 0.0
    %86 = vmatprep.subr.mxu0 0.0
    %87 = vmatpush2.msra.mxu0 0.0
    %88 = vmatprep.subr.mxu0 0.0
    %89 = vmatpush2.msra.mxu0 0.0
    %90 = vmatprep.subr.mxu0 0.0
    %91 = vmatpush2.msra.mxu0 0.0
    %92 = vmatprep.subr.mxu0 0.0
    %93 = vmatpush2.msra.mxu0 0.0
    %94 = vmatprep.subr.mxu0 0.0
    %95 = vmatpush2.msra.mxu0 0.0
    %96 = vmatprep.subr.mxu0 0.0
    %97 = vmatpush2.msra.mxu0 0.0
    %98 = vmatprep.subr.mxu0 0.0
    %99 = vmatpush2.msra.mxu0 0.0
    %100 = vmatprep.subr.mxu0 0.0
    %101 = vmatpush2.msra.mxu0 0.0
    %102 = vmatprep.subr.mxu0 0.0
    %103 = vmatpush2.msra.mxu0 0.0
    %104 = vmatprep.subr.mxu0 0.0
    %105 = vmatpush2.msra.mxu0 0.0
    %106 = vmatprep.subr.mxu0 0.0
    %107 = vmatpush2.msra.mxu0 0.0
    %108 = vmatprep.mubr.f32.mxu0 0.0
    %109 = vmatmul.mubr.f32.gmra.mxu0 %v42
    %v110 = vpop.f32.mrf.mxu0
    %v111 = vadd.f32 %v38, %v110
    %v112 = vpop.f32.mrf.mxu0
    %113 = vdwg.mxu0
    %v114 = vmax.f32 %v111, 0.0
    %v115 = vld [vmem:[%s3] sm:$0xff]
    %v116 = vld [vmem:[%s3 + $0x8] sm:$0xff]
    %v117 = vld [vmem:[%s3 + $0x10] sm:$0xff]
    %v118 = vld [vmem:[%s3 + $0x18] sm:$0xff]
    %v119 = vld [vmem:[%s3 + $0x20] sm:$0xff]
    %v120 = vld [vmem:[%s3 + $0x28] sm:$0xff]
    %v121 = vld [vmem:[%s3 + $0x30] sm:$0xff]
    %v122 = vld [vmem:[%s3 + $0x38] sm:$0xff]
    %v123 = vld [vmem:[%s4] sm:$0x1]
    %v125 = vlaneseq
    %v126 = vshrl.u32 %v125, 7
    %v127 = vsub.s32 0, %v126
    %v128 = vrot.slane %v123, %v127
    %vm130 = vcmask 523264
    %v132 = vsel %vm130, %v114, 0
    %134 = vmatprep.subr.mxu0 0.0
    %135 = vmatpush1.msra.mxu0 0.0
    %136 = vmatprep.subr.mxu0 0.0
    %137 = vmatpush1.msra.mxu0 0.0
    %138 = vmatprep.subr.mxu0 0.0
    %139 = vmatpush1.msra.mxu0 0.0
    %140 = vmatprep.subr.mxu0 0.0
    %141 = vmatpush1.msra.mxu0 0.0
    %142 = vmatprep.subr.mxu0 0.0
    %143 = vmatpush1.msra.mxu0 0.0
    %144 = vmatprep.subr.mxu0 0.0
    %145 = vmatpush1.msra.mxu0 0.0
    %146 = vmatprep.subr.mxu0 0.0
    %147 = vmatpush1.msra.mxu0 0.0
    %148 = vmatprep.subr.mxu0 0.0
    %149 = vmatpush1.msra.mxu0 0.0
    %150 = vmatprep.subr.mxu0 0.0
    %151 = vmatpush1.msra.mxu0 %v122
    %152 = vmatprep.subr.mxu0 0.0
    %153 = vmatpush1.msra.mxu0 %v121
    %154 = vmatprep.subr.mxu0 0.0
    %155 = vmatpush1.msra.mxu0 %v120
    %156 = vmatprep.subr.mxu0 0.0
    %157 = vmatpush1.msra.mxu0 %v119
    %158 = vmatprep.subr.mxu0 0.0
    %159 = vmatpush1.msra.mxu0 %v118
    %160 = vmatprep.subr.mxu0 0.0
    %161 = vmatpush1.msra.mxu0 %v117
    %162 = vmatprep.subr.mxu0 0.0
    %163 = vmatpush1.msra.mxu0 %v116
    %164 = vmatprep.subr.mxu0 0.0
    %165 = vmatpush1.msra.mxu0 %v115
    %166 = vmatprep.subr.mxu0 0.0
    %167 = vmatpush2.msra.mxu0 0.0
    %168 = vmatprep.subr.mxu0 0.0
    %169 = vmatpush2.msra.mxu0 0.0
    %170 = vmatprep.subr.mxu0 0.0
    %171 = vmatpush2.msra.mxu0 0.0
    %172 = vmatprep.subr.mxu0 0.0
    %173 = vmatpush2.msra.mxu0 0.0
    %174 = vmatprep.subr.mxu0 0.0
    %175 = vmatpush2.msra.mxu0 0.0
    %176 = vmatprep.subr.mxu0 0.0
    %177 = vmatpush2.msra.mxu0 0.0
    %178 = vmatprep.subr.mxu0 0.0
    %179 = vmatpush2.msra.mxu0 0.0
    %180 = vmatprep.subr.mxu0 0.0
    %181 = vmatpush2.msra.mxu0 0.0
    %182 = vmatprep.subr.mxu0 0.0
    %183 = vmatpush2.msra.mxu0 0.0
    %184 = vmatprep.subr.mxu0 0.0
    %185 = vmatpush2.msra.mxu0 0.0
    %186 = vmatprep.subr.mxu0 0.0
    %187 = vmatpush2.msra.mxu0 0.0
    %188 = vmatprep.subr.mxu0 0.0
    %189 = vmatpush2.msra.mxu0 0.0
    %190 = vmatprep.subr.mxu0 0.0
    %191 = vmatpush2.msra.mxu0 0.0
    %192 = vmatprep.subr.mxu0 0.0
    %193 = vmatpush2.msra.mxu0 0.0
    %194 = vmatprep.subr.mxu0 0.0
    %195 = vmatpush2.msra.mxu0 0.0
    %196 = vmatprep.subr.mxu0 0.0
    %197 = vmatpush2.msra.mxu0 0.0
    %198 = vmatprep.mubr.f32.mxu0 0.0
    %199 = vmatmul.mubr.f32.gmra.mxu0 %v132
    %v200 = vpop.f32.mrf.mxu0
    %v201 = vadd.f32 %v128, %v200
    %v202 = vpop.f32.mrf.mxu0
    %203 = vdwg.mxu0
    %v204 = vmax.f32 %v201, 0.0
    %v205 = vld [vmem:[%s5] sm:$0x1]
    %s206 = sld [smem:[#allocation2]]
    %v207 = vstv %s206
    %v209 = vsel %vm40, %v205, 0
    %v212 = vsel %vm40, %v204, 0
    %214 = vmatprep.subr.mxu0 0.0
    %215 = vmatpush1.xpose.msra.mxu0 0.0
    %216 = vmatprep.subr.mxu0 0.0
    %217 = vmatpush1.xpose.msra.mxu0 0.0
    %218 = vmatprep.subr.mxu0 0.0
    %219 = vmatpush1.xpose.msra.mxu0 0.0
    %220 = vmatprep.subr.mxu0 0.0
    %221 = vmatpush1.xpose.msra.mxu0 0.0
    %222 = vmatprep.subr.mxu0 0.0
    %223 = vmatpush1.xpose.msra.mxu0 0.0
    %224 = vmatprep.subr.mxu0 0.0
    %225 = vmatpush1.xpose.msra.mxu0 0.0
    %226 = vmatprep.subr.mxu0 0.0
    %227 = vmatpush1.xpose.msra.mxu0 0.0
    %228 = vmatprep.subr.mxu0 0.0
    %229 = vmatpush1.xpose.msra.mxu0 0.0
    %230 = vmatprep.subr.mxu0 0.0
    %231 = vmatpush1.xpose.msra.mxu0 0.0
    %232 = vmatprep.subr.mxu0 0.0
    %233 = vmatpush1.xpose.msra.mxu0 0.0
    %234 = vmatprep.subr.mxu0 0.0
    %235 = vmatpush1.xpose.msra.mxu0 0.0
    %236 = vmatprep.subr.mxu0 0.0
    %237 = vmatpush1.xpose.msra.mxu0 0.0
    %238 = vmatprep.subr.mxu0 0.0
    %239 = vmatpush1.xpose.msra.mxu0 0.0
    %240 = vmatprep.subr.mxu0 0.0
    %241 = vmatpush1.xpose.msra.mxu0 0.0
    %242 = vmatprep.subr.mxu0 0.0
    %243 = vmatpush1.xpose.msra.mxu0 0.0
    %244 = vmatprep.subr.mxu0 0.0
    %245 = vmatpush1.xpose.msra.mxu0 %v212
    %246 = vmatprep.subr.mxu0 0.0
    %247 = vmatpush2.xpose.msra.mxu0 0.0
    %248 = vmatprep.subr.mxu0 0.0
    %249 = vmatpush2.xpose.msra.mxu0 0.0
    %250 = vmatprep.subr.mxu0 0.0
    %251 = vmatpush2.xpose.msra.mxu0 0.0
    %252 = vmatprep.subr.mxu0 0.0
    %253 = vmatpush2.xpose.msra.mxu0 0.0
    %254 = vmatprep.subr.mxu0 0.0
    %255 = vmatpush2.xpose.msra.mxu0 0.0
    %256 = vmatprep.subr.mxu0 0.0
    %257 = vmatpush2.xpose.msra.mxu0 0.0
    %258 = vmatprep.subr.mxu0 0.0
    %259 = vmatpush2.xpose.msra.mxu0 0.0
    %260 = vmatprep.subr.mxu0 0.0
    %261 = vmatpush2.xpose.msra.mxu0 0.0
    %262 = vmatprep.subr.mxu0 0.0
    %263 = vmatpush2.xpose.msra.mxu0 0.0
    %264 = vmatprep.subr.mxu0 0.0
    %265 = vmatpush2.xpose.msra.mxu0 0.0
    %266 = vmatprep.subr.mxu0 0.0
    %267 = vmatpush2.xpose.msra.mxu0 0.0
    %268 = vmatprep.subr.mxu0 0.0
    %269 = vmatpush2.xpose.msra.mxu0 0.0
    %270 = vmatprep.subr.mxu0 0.0
    %271 = vmatpush2.xpose.msra.mxu0 0.0
    %272 = vmatprep.subr.mxu0 0.0
    %273 = vmatpush2.xpose.msra.mxu0 0.0
    %274 = vmatprep.subr.mxu0 0.0
    %275 = vmatpush2.xpose.msra.mxu0 0.0
    %276 = vmatprep.subr.mxu0 0.0
    %277 = vmatpush2.xpose.msra.mxu0 0.0
    %278 = vmatprep.mubr.f32.mxu0 0.0
    %279 = vmatmul.mubr.f32.gmra.mxu0 %v209
    %v280 = vpop.f32.mrf.mxu0
    %v281 = vadd.f32 %v207, %v280
    %v282 = vpop.f32.mrf.mxu0
    %283 = vdwg.mxu0
    %vm284 = vcmask 57344
    %285 = vst.msk [vmem:[#allocation3] sm:$0x1] %vm284, %v281
    // Predicated region
    $region30: #{tpu_custom_call.1} parent=1 // pred_check
      _
    $region31: #{tpu_custom_call.1} parent=1 // pred_check_branch
      %287 = sbr.rel (0) target = $region33
    $region32: #{tpu_custom_call.1} parent=1 // pred_region
      %s289 = ssub.s32 16, 16
      %290 = vsyncadd [#allocation4], %s289
      %s292 = sshll.u32 [#allocation3], 4
      %s293 = int_to_ptr.vmem [resolvable:$true] %s292
      %295 = dma.vmem_to_hbm [thread:$0]  %s293, 16, %s7, [#allocation4]
    $region33: #{tpu_custom_call.1} parent=1 // pred_fallthru
      _
    // Predicated region
    $region34: #{tpu_custom_call.1} parent=1 // pred_check
      _
    $region35: #{tpu_custom_call.1} parent=1 // pred_check_branch
      %297 = sbr.rel (0) target = $region37
    $region36: #{tpu_custom_call.1} parent=1 // pred_region
      %298 = dma.done [#allocation4], 16
    $region37: #{tpu_custom_call.1} parent=1 // pred_fallthru
      _
    %299 = vsyncpa [#allocation4], 1

</llo_original>
